<compile_context>
chip_gen: v7x
topology: tpu7x:2x2x1
jax: 0.10.0
libtpu: 0.0.40
codegen_flags: <defaults>
</compile_context>

<pallas_src>
import functools

import jax
import jax.numpy as jnp
from jax import lax
from jax.experimental import pallas as pl
from jax.experimental.pallas import tpu as pltpu

ALPHABET = ['(', ')', '<|BOS|>']   # word_embedding() appends BOS
DIMS = 10                          # 2*(3 symbols + TRUE) + 2 from make_room
HIDDEN = 2
D_PAD = 128                        # lane padding

# Column indices of the compiled program (operations: Q_(, Q_), Q_<|BOS|>, TRUE, ONE)
_Q_BOS = 2 * 2        # 2 * q_bos_index       -> 4
_TRUE = 2 * 3         # 2 * true_index        -> 6
_ONE = DIMS - 2       # ONE counter column    -> 8   (and 9 = its complement)
_C = 1                # add_CONST(1, 'ONE')


# ------------------------- parameter construction -------------------------
def build_word_embedding():
    """word_embedding() from compiler.py, padded by make_room to 10 dims."""
    emb = {}
    n = len(ALPHABET)
    for i, word in enumerate(ALPHABET):
        rows = [[-1.0, 1.0] if j == i else [1.0, -1.0] for j in range(n)]
        rows.append([-1.0, 1.0])                       # TRUE row
        vec = jnp.asarray(rows, dtype=jnp.float32).reshape(-1)   # (8,)
        emb[word] = jnp.concatenate([vec, jnp.zeros(2, jnp.float32)])  # (10,)
    return emb


def build_params():
    """Dense weights created by add_CONST(1, 'ONE') -- used by the pure-JAX
    reference only; the Pallas kernel bakes these constants directly."""
    wv = jnp.zeros((DIMS, DIMS), jnp.float32)
    wv = wv.at[DIMS - 2, DIMS - 2].set(1.0)
    wv = wv.at[DIMS - 2, _Q_BOS].set(1.0)
    wv = wv.at[DIMS - 1, DIMS - 1].set(1.0)
    wv = wv.at[DIMS - 1, _Q_BOS + 1].set(1.0)

    w1 = jnp.zeros((HIDDEN, DIMS), jnp.float32)
    w1 = w1.at[0, DIMS - 2].set(-0.5)
    w1 = w1.at[0, _TRUE].set(-0.5)
    w1 = w1.at[1, _TRUE].set(-1.0)

    w2 = jnp.zeros((DIMS, HIDDEN), jnp.float32)
    w2 = w2.at[DIMS - 2, 0].set(float(2 - _C))
    w2 = w2.at[DIMS - 2, 1].set(-1.0)
    w2 = w2.at[DIMS - 1, 0].set(-float(2 - _C))
    w2 = w2.at[DIMS - 1, 1].set(1.0)
    return wv, w1, w2


# ------------------------------- Pallas kernel -----------------------------
def crasp_transformer_kernel(inv_ref, x_ref, o_ref, v_ref, run_ref):
    """Fused attention + FFN layer on one sequence tile.

    inv_ref : (T, 1)   precomputed 1/(i+1) (0 on padded rows)
    x_ref   : (T, 128) embedded input tile (features zero-padded to 128 lanes)
    o_ref   : (T, 128) output tile
    v_ref   : (T, 128) VMEM scratch holding v, then its prefix sums
    run_ref : (1, 128) VMEM scratch: running prefix sum carried across tiles
    """
    @pl.when(pl.program_id(0) == 0)
    def _():
        run_ref[...] = jnp.zeros_like(run_ref)

    x = x_ref[...]                                   # (T, 128) f32
    T, D = x.shape
    lane = lax.broadcasted_iota(jnp.int32, (T, D), 1)

    def col(arr, j):
        """Extract lane j as a (T, 1) column (lane-masked XLU reduce)."""
        return jnp.sum(jnp.where(lane == j, arr, 0.0), axis=1, keepdims=True)

    # --- self-attention, Q = K = 0  =>  causal prefix average of v = x @ Wv^T.
    # Wv baked:  v[:, 8] = x[:, 8] + x[:, 4];  v[:, 9] = x[:, 9] + x[:, 5].
    c_bos0 = col(x, _Q_BOS)
    c_bos1 = col(x, _Q_BOS + 1)
    v = jnp.where(lane == _ONE, x + c_bos0,
                  jnp.where(lane == _ONE + 1, x + c_bos1, 0.0))
    v_ref[...] = v

    # Inclusive prefix sum over rows; running total carried across grid tiles.
    def body(i, run):
        run = run + v_ref[pl.ds(i, 1), :]
        v_ref[pl.ds(i, 1), :] = run
        return run

    run_out = lax.fori_loop(0, T, body, run_ref[...], unroll=(T <= 32))
    run_ref[...] = run_out

    # out_proj is the identity in the compiled program -> residual add only.
    x = x + v_ref[...] * inv_ref[...]                # attn[i] = prefix[i] / (i+1)

    # --- feed-forward: x + ReLU(x @ W1^T) @ W2^T, W1/W2 baked (c = 1):
    #   h0 = relu(-0.5*x[:,8] - 0.5*x[:,6]),  h1 = relu(-x[:,6])
    #   delta[:,8] = (2-c)*h0 - h1,  delta[:,9] = -delta[:,8]
    c_true = col(x, _TRUE)
    c_one = col(x, _ONE)
    h0 = jnp.maximum(-0.5 * (c_one + c_true), 0.0)
    h1 = jnp.maximum(-c_true, 0.0)
    d = float(2 - _C) * h0 - h1
    delta = jnp.where(lane == _ONE, d,
                      jnp.where(lane == _ONE + 1, -d, 0.0))

    o_ref[...] = x + delta


# --------------------------------- wrapper ---------------------------------
def _pad_up(n, m):
    return ((n + m - 1) // m) * m


@jax.jit
def crasp_transformer_forward(x_emb):
    """Pad to TPU-friendly shapes, run the fused kernel over a seq grid."""
    L, D = x_emb.shape

    if L <= 512:
        tile_l = _pad_up(max(L, 8), 8)
        l_pad = tile_l
    else:
        tile_l = 512
        l_pad = _pad_up(L, tile_l)
    num_tiles = l_pad // tile_l

    # 1/(i+1) per real row, 0 on padded rows (keeps padded rows exactly zero).
    idx = jnp.arange(l_pad, dtype=jnp.float32)
    inv = jnp.where(idx < L, 1.0 / (idx + 1.0), 0.0).reshape(l_pad, 1)

    xp = jnp.zeros((l_pad, D_PAD), jnp.float32).at[:L, :D].set(x_emb)

    out = pl.pallas_call(
        crasp_transformer_kernel,
        out_shape=jax.ShapeDtypeStruct((l_pad, D_PAD), jnp.float32),
        grid_spec=pltpu.PrefetchScalarGridSpec(
            num_scalar_prefetch=0,
            grid=(num_tiles,),
            in_specs=[
                pl.BlockSpec((tile_l, 1), lambda i: (i, 0)),       # inv_len
                pl.BlockSpec((tile_l, D_PAD), lambda i: (i, 0)),   # x
            ],
            out_specs=pl.BlockSpec((tile_l, D_PAD), lambda i: (i, 0)),
            scratch_shapes=[
                pltpu.VMEM((tile_l, D_PAD), jnp.float32),   # v / prefix sums
                pltpu.VMEM((1, D_PAD), jnp.float32),        # carried running sum
            ],
        ),
        compiler_params=pltpu.CompilerParams(
            dimension_semantics=("arbitrary",)),   # sequential: prefix carry
        input_output_aliases={1: 0},               # reuse xp's buffer for out
    )(inv, xp)
    return out[:L, :D]


# ------------------------------ pure-JAX reference -------------------------
def reference_forward(x, wv, w1, w2):
    L = x.shape[0]
    v = x @ wv.T
    idx = jnp.arange(L)
    A = (idx[None, :] <= idx[:, None]).astype(jnp.float32) / (idx[:, None] + 1.0)
    x = x + A @ v
    h = jax.nn.relu(x @ w1.T)
    return x + h @ w2.T


# ----------------------------------- main ----------------------------------
if __name__ == "__main__":
    key = jax.random.PRNGKey(0)
    n_tokens = 7
    tok_ids = jax.random.randint(key, (n_tokens,), 0, 2)        # 0 -> '(', 1 -> ')'
    words = ['<|BOS|>'] + [ALPHABET[int(t)] for t in tok_ids]   # forward prepends BOS

    emb = build_word_embedding()
    x_emb = jnp.stack([emb[w] for w in words]).astype(jnp.float32)   # (8, 10)

    out = crasp_transformer_forward(x_emb)
    out = jax.block_until_ready(out)

    wv, w1, w2 = build_params()
    ref = reference_forward(x_emb, wv, w1, w2)

    assert out.shape == (len(words), DIMS)
    assert jnp.allclose(out, ref, atol=1e-5, rtol=1e-5), "kernel mismatch vs reference"

    # sanity: the compiled ONE counter encodes value 1 at position i as -1/(i+1)
    expected_one = -1.0 / (jnp.arange(len(words), dtype=jnp.float32) + 1.0)
    assert jnp.allclose(out[:, DIMS - 2], expected_one, atol=1e-5)

    print("KERNEL_OK")
</pallas_src>

<mosaic_0001>
module attributes {stable_mosaic.version = 11 : i64} {
  func.func @crasp_transformer_kernel(%arg0: i32, %arg1: memref<8x1xf32, #tpu.memory_space<vmem>>, %arg2: memref<8x128xf32, #tpu.memory_space<vmem>>, %arg3: memref<8x128xf32, #tpu.memory_space<vmem>>, %arg4: memref<8x128xf32, #tpu.memory_space<vmem>>, %arg5: memref<1x128xf32, #tpu.memory_space<vmem>>) attributes {dimension_semantics = [#tpu.dimension_semantics<arbitrary>], iteration_bounds = array<i64: 1>, scalar_prefetch = 0 : i64, scratch_operands = 2 : i64, tpu.core_type = #tpu.core_type<tc>, window_params = [{transform_indices = @transform_0, window_bounds = array<i64: 8, 1>}, {transform_indices = @transform_1, window_bounds = array<i64: 8, 128>}, {transform_indices = @transform_2, window_bounds = array<i64: 8, 128>}]} {
    %c0_i32 = arith.constant 0 : i32
    %0 = arith.cmpi eq, %arg0, %c0_i32 : i32
    %1 = arith.extui %0 : i1 to i32
    %c0_i32_0 = arith.constant 0 : i32
    %2 = arith.cmpi ne, %1, %c0_i32_0 : i32
    scf.if %2 {
      %cst_53 = arith.constant 0.000000e+00 : f32
      %115 = vector.broadcast %cst_53 : f32 to vector<1x128xf32>
      %c0_54 = arith.constant 0 : index
      %c0_55 = arith.constant 0 : index
      %116 = vector.load %arg5[%c0_54, %c0_55] : memref<1x128xf32, #tpu.memory_space<vmem>>, vector<1x128xf32>
      tpu.vector_store %arg5[%c0_54, %c0_55], %115 {strides = array<i32>} : memref<1x128xf32, #tpu.memory_space<vmem>>, vector<1x128xf32>,
    } else {
    }
    %c0 = arith.constant 0 : index
    %c0_1 = arith.constant 0 : index
    %3 = vector.load %arg2[%c0, %c0_1] : memref<8x128xf32, #tpu.memory_space<vmem>>, vector<8x128xf32>
    %4 = tpu.iota {dimensions = array<i32: 1>} : vector<8x128xi32>
    %c4_i32 = arith.constant 4 : i32
    %5 = vector.broadcast %c4_i32 : i32 to vector<8x128xi32>
    %6 = arith.cmpi eq, %4, %5 : vector<8x128xi32>
    %cst = arith.constant 0.000000e+00 : f32
    %7 = vector.broadcast %cst : f32 to vector<8x128xf32>
    %8 = arith.select %6, %3, %7 : vector<8x128xi1>, vector<8x128xf32>
    %cst_2 = arith.constant dense<0.000000e+00> : vector<8xf32>
    %9 = vector.multi_reduction <add>, %8, %cst_2 [1] : vector<8x128xf32> to vector<8xf32>
    %10 = vector.shape_cast %9 : vector<8xf32> to vector<8x1xf32>
    %c5_i32 = arith.constant 5 : i32
    %11 = vector.broadcast %c5_i32 : i32 to vector<8x128xi32>
    %12 = arith.cmpi eq, %4, %11 : vector<8x128xi32>
    %cst_3 = arith.constant 0.000000e+00 : f32
    %13 = vector.broadcast %cst_3 : f32 to vector<8x128xf32>
    %14 = arith.select %12, %3, %13 : vector<8x128xi1>, vector<8x128xf32>
    %cst_4 = arith.constant dense<0.000000e+00> : vector<8xf32>
    %15 = vector.multi_reduction <add>, %14, %cst_4 [1] : vector<8x128xf32> to vector<8xf32>
    %16 = vector.shape_cast %15 : vector<8xf32> to vector<8x1xf32>
    %c8_i32 = arith.constant 8 : i32
    %17 = vector.broadcast %c8_i32 : i32 to vector<8x128xi32>
    %18 = arith.cmpi eq, %4, %17 : vector<8x128xi32>
    %19 = vector.broadcast %10 : vector<8x1xf32> to vector<8x128xf32>
    %20 = arith.addf %3, %19 : vector<8x128xf32>
    %c9_i32 = arith.constant 9 : i32
    %21 = vector.broadcast %c9_i32 : i32 to vector<8x128xi32>
    %22 = arith.cmpi eq, %4, %21 : vector<8x128xi32>
    %23 = vector.broadcast %16 : vector<8x1xf32> to vector<8x128xf32>
    %24 = arith.addf %3, %23 : vector<8x128xf32>
    %cst_5 = arith.constant 0.000000e+00 : f32
    %25 = vector.broadcast %cst_5 : f32 to vector<8x128xf32>
    %26 = arith.select %22, %24, %25 : vector<8x128xi1>, vector<8x128xf32>
    %27 = arith.select %18, %20, %26 : vector<8x128xi1>, vector<8x128xf32>
    %c0_6 = arith.constant 0 : index
    %c0_7 = arith.constant 0 : index
    %28 = vector.load %arg4[%c0_6, %c0_7] : memref<8x128xf32, #tpu.memory_space<vmem>>, vector<8x128xf32>
    tpu.vector_store %arg4[%c0_6, %c0_7], %27 {strides = array<i32>} : memref<8x128xf32, #tpu.memory_space<vmem>>, vector<8x128xf32>,
    %c0_8 = arith.constant 0 : index
    %c0_9 = arith.constant 0 : index
    %29 = vector.load %arg5[%c0_8, %c0_9] : memref<1x128xf32, #tpu.memory_space<vmem>>, vector<1x128xf32>
    %c0_i32_10 = arith.constant 0 : i32
    %30 = arith.index_cast %c0_i32_10 : i32 to index
    %c0_11 = arith.constant 0 : index
    %31 = vector.load %arg4[%30, %c0_11] : memref<8x128xf32, #tpu.memory_space<vmem>>, vector<1x128xf32>
    %32 = arith.addf %29, %31 : vector<1x128xf32>
    %33 = arith.index_cast %c0_i32_10 : i32 to index
    %c0_12 = arith.constant 0 : index
    %34 = vector.load %arg4[%33, %c0_12] : memref<8x128xf32, #tpu.memory_space<vmem>>, vector<1x128xf32>
    tpu.vector_store %arg4[%33, %c0_12], %32 {strides = array<i32>} : memref<8x128xf32, #tpu.memory_space<vmem>>, vector<1x128xf32>,
    %c1_i32 = arith.constant 1 : i32
    %35 = arith.index_cast %c1_i32 : i32 to index
    %c0_13 = arith.constant 0 : index
    %36 = vector.load %arg4[%35, %c0_13] : memref<8x128xf32, #tpu.memory_space<vmem>>, vector<1x128xf32>
    %37 = arith.addf %32, %36 : vector<1x128xf32>
    %38 = arith.index_cast %c1_i32 : i32 to index
    %c0_14 = arith.constant 0 : index
    %39 = vector.load %arg4[%38, %c0_14] : memref<8x128xf32, #tpu.memory_space<vmem>>, vector<1x128xf32>
    tpu.vector_store %arg4[%38, %c0_14], %37 {strides = array<i32>} : memref<8x128xf32, #tpu.memory_space<vmem>>, vector<1x128xf32>,
    %c2_i32 = arith.constant 2 : i32
    %40 = arith.index_cast %c2_i32 : i32 to index
    %c0_15 = arith.constant 0 : index
    %41 = vector.load %arg4[%40, %c0_15] : memref<8x128xf32, #tpu.memory_space<vmem>>, vector<1x128xf32>
    %42 = arith.addf %37, %41 : vector<1x128xf32>
    %43 = arith.index_cast %c2_i32 : i32 to index
    %c0_16 = arith.constant 0 : index
    %44 = vector.load %arg4[%43, %c0_16] : memref<8x128xf32, #tpu.memory_space<vmem>>, vector<1x128xf32>
    tpu.vector_store %arg4[%43, %c0_16], %42 {strides = array<i32>} : memref<8x128xf32, #tpu.memory_space<vmem>>, vector<1x128xf32>,
    %c3_i32 = arith.constant 3 : i32
    %45 = arith.index_cast %c3_i32 : i32 to index
    %c0_17 = arith.constant 0 : index
    %46 = vector.load %arg4[%45, %c0_17] : memref<8x128xf32, #tpu.memory_space<vmem>>, vector<1x128xf32>
    %47 = arith.addf %42, %46 : vector<1x128xf32>
    %48 = arith.index_cast %c3_i32 : i32 to index
    %c0_18 = arith.constant 0 : index
    %49 = vector.load %arg4[%48, %c0_18] : memref<8x128xf32, #tpu.memory_space<vmem>>, vector<1x128xf32>
    tpu.vector_store %arg4[%48, %c0_18], %47 {strides = array<i32>} : memref<8x128xf32, #tpu.memory_space<vmem>>, vector<1x128xf32>,
    %c4_i32_19 = arith.constant 4 : i32
    %50 = arith.index_cast %c4_i32_19 : i32 to index
    %c0_20 = arith.constant 0 : index
    %51 = vector.load %arg4[%50, %c0_20] : memref<8x128xf32, #tpu.memory_space<vmem>>, vector<1x128xf32>
    %52 = arith.addf %47, %51 : vector<1x128xf32>
    %53 = arith.index_cast %c4_i32_19 : i32 to index
    %c0_21 = arith.constant 0 : index
    %54 = vector.load %arg4[%53, %c0_21] : memref<8x128xf32, #tpu.memory_space<vmem>>, vector<1x128xf32>
    tpu.vector_store %arg4[%53, %c0_21], %52 {strides = array<i32>} : memref<8x128xf32, #tpu.memory_space<vmem>>, vector<1x128xf32>,
    %c5_i32_22 = arith.constant 5 : i32
    %55 = arith.index_cast %c5_i32_22 : i32 to index
    %c0_23 = arith.constant 0 : index
    %56 = vector.load %arg4[%55, %c0_23] : memref<8x128xf32, #tpu.memory_space<vmem>>, vector<1x128xf32>
    %57 = arith.addf %52, %56 : vector<1x128xf32>
    %58 = arith.index_cast %c5_i32_22 : i32 to index
    %c0_24 = arith.constant 0 : index
    %59 = vector.load %arg4[%58, %c0_24] : memref<8x128xf32, #tpu.memory_space<vmem>>, vector<1x128xf32>
    tpu.vector_store %arg4[%58, %c0_24], %57 {strides = array<i32>} : memref<8x128xf32, #tpu.memory_space<vmem>>, vector<1x128xf32>,
    %c6_i32 = arith.constant 6 : i32
    %60 = arith.index_cast %c6_i32 : i32 to index
    %c0_25 = arith.constant 0 : index
    %61 = vector.load %arg4[%60, %c0_25] : memref<8x128xf32, #tpu.memory_space<vmem>>, vector<1x128xf32>
    %62 = arith.addf %57, %61 : vector<1x128xf32>
    %63 = arith.index_cast %c6_i32 : i32 to index
    %c0_26 = arith.constant 0 : index
    %64 = vector.load %arg4[%63, %c0_26] : memref<8x128xf32, #tpu.memory_space<vmem>>, vector<1x128xf32>
    tpu.vector_store %arg4[%63, %c0_26], %62 {strides = array<i32>} : memref<8x128xf32, #tpu.memory_space<vmem>>, vector<1x128xf32>,
    %c7_i32 = arith.constant 7 : i32
    %65 = arith.index_cast %c7_i32 : i32 to index
    %c0_27 = arith.constant 0 : index
    %66 = vector.load %arg4[%65, %c0_27] : memref<8x128xf32, #tpu.memory_space<vmem>>, vector<1x128xf32>
    %67 = arith.addf %62, %66 : vector<1x128xf32>
    %68 = arith.index_cast %c7_i32 : i32 to index
    %c0_28 = arith.constant 0 : index
    %69 = vector.load %arg4[%68, %c0_28] : memref<8x128xf32, #tpu.memory_space<vmem>>, vector<1x128xf32>
    tpu.vector_store %arg4[%68, %c0_28], %67 {strides = array<i32>} : memref<8x128xf32, #tpu.memory_space<vmem>>, vector<1x128xf32>,
    %c8_i32_29 = arith.constant 8 : i32
    %c0_30 = arith.constant 0 : index
    %c0_31 = arith.constant 0 : index
    %70 = vector.load %arg5[%c0_30, %c0_31] : memref<1x128xf32, #tpu.memory_space<vmem>>, vector<1x128xf32>
    tpu.vector_store %arg5[%c0_30, %c0_31], %67 {strides = array<i32>} : memref<1x128xf32, #tpu.memory_space<vmem>>, vector<1x128xf32>,
    %c0_32 = arith.constant 0 : index
    %c0_33 = arith.constant 0 : index
    %71 = vector.load %arg4[%c0_32, %c0_33] : memref<8x128xf32, #tpu.memory_space<vmem>>, vector<8x128xf32>
    %c0_34 = arith.constant 0 : index
    %c0_35 = arith.constant 0 : index
    %72 = vector.load %arg1[%c0_34, %c0_35] : memref<8x1xf32, #tpu.memory_space<vmem>>, vector<8x1xf32>
    %73 = vector.broadcast %72 : vector<8x1xf32> to vector<8x128xf32>
    %74 = arith.mulf %71, %73 : vector<8x128xf32>
    %75 = arith.addf %3, %74 : vector<8x128xf32>
    %c6_i32_36 = arith.constant 6 : i32
    %76 = vector.broadcast %c6_i32_36 : i32 to vector<8x128xi32>
    %77 = arith.cmpi eq, %4, %76 : vector<8x128xi32>
    %cst_37 = arith.constant 0.000000e+00 : f32
    %78 = vector.broadcast %cst_37 : f32 to vector<8x128xf32>
    %79 = arith.select %77, %75, %78 : vector<8x128xi1>, vector<8x128xf32>
    %cst_38 = arith.constant dense<0.000000e+00> : vector<8xf32>
    %80 = vector.multi_reduction <add>, %79, %cst_38 [1] : vector<8x128xf32> to vector<8xf32>
    %81 = vector.shape_cast %80 : vector<8xf32> to vector<8x1xf32>
    %c8_i32_39 = arith.constant 8 : i32
    %82 = vector.broadcast %c8_i32_39 : i32 to vector<8x128xi32>
    %83 = arith.cmpi eq, %4, %82 : vector<8x128xi32>
    %cst_40 = arith.constant 0.000000e+00 : f32
    %84 = vector.broadcast %cst_40 : f32 to vector<8x128xf32>
    %85 = arith.select %83, %75, %84 : vector<8x128xi1>, vector<8x128xf32>
    %cst_41 = arith.constant dense<0.000000e+00> : vector<8xf32>
    %86 = vector.multi_reduction <add>, %85, %cst_41 [1] : vector<8x128xf32> to vector<8xf32>
    %87 = vector.shape_cast %86 : vector<8xf32> to vector<8x1xf32>
    %88 = arith.addf %87, %81 : vector<8x1xf32>
    %cst_42 = arith.constant -5.000000e-01 : f32
    %89 = vector.broadcast %cst_42 : f32 to vector<8x1xf32>
    %90 = arith.mulf %89, %88 : vector<8x1xf32>
    %cst_43 = arith.constant 0.000000e+00 : f32
    %91 = vector.broadcast %cst_43 : f32 to vector<8x1xf32>
    %92 = arith.maximumf %90, %91 : vector<8x1xf32>
    %cst_44 = arith.constant 0.000000e+00 : f32
    %93 = vector.broadcast %cst_44 : f32 to vector<8x1xf32>
    %94 = arith.subf %93, %81 : vector<8x1xf32>
    %cst_45 = arith.constant 0.000000e+00 : f32
    %95 = vector.broadcast %cst_45 : f32 to vector<8x1xf32>
    %96 = arith.maximumf %94, %95 : vector<8x1xf32>
    %cst_46 = arith.constant 1.000000e+00 : f32
    %97 = vector.broadcast %cst_46 : f32 to vector<8x1xf32>
    %98 = arith.mulf %97, %92 : vector<8x1xf32>
    %99 = arith.subf %98, %96 : vector<8x1xf32>
    %c8_i32_47 = arith.constant 8 : i32
    %100 = vector.broadcast %c8_i32_47 : i32 to vector<8x128xi32>
    %101 = arith.cmpi eq, %4, %100 : vector<8x128xi32>
    %c9_i32_48 = arith.constant 9 : i32
    %102 = vector.broadcast %c9_i32_48 : i32 to vector<8x128xi32>
    %103 = arith.cmpi eq, %4, %102 : vector<8x128xi32>
    %cst_49 = arith.constant 0.000000e+00 : f32
    %104 = vector.broadcast %cst_49 : f32 to vector<8x1xf32>
    %105 = arith.subf %104, %99 : vector<8x1xf32>
    %cst_50 = arith.constant 0.000000e+00 : f32
    %106 = vector.shape_cast %105 : vector<8x1xf32> to vector<8x1xf32>
    %107 = vector.broadcast %106 : vector<8x1xf32> to vector<8x128xf32>
    %108 = vector.broadcast %cst_50 : f32 to vector<8x128xf32>
    %109 = arith.select %103, %107, %108 : vector<8x128xi1>, vector<8x128xf32>
    %110 = vector.shape_cast %99 : vector<8x1xf32> to vector<8x1xf32>
    %111 = vector.broadcast %110 : vector<8x1xf32> to vector<8x128xf32>
    %112 = arith.select %101, %111, %109 : vector<8x128xi1>, vector<8x128xf32>
    %113 = arith.addf %75, %112 : vector<8x128xf32>
    %c0_51 = arith.constant 0 : index
    %c0_52 = arith.constant 0 : index
    %114 = vector.load %arg3[%c0_51, %c0_52] : memref<8x128xf32, #tpu.memory_space<vmem>>, vector<8x128xf32>
    tpu.vector_store %arg3[%c0_51, %c0_52], %113 {strides = array<i32>} : memref<8x128xf32, #tpu.memory_space<vmem>>, vector<8x128xf32>,
    return
  }
  func.func @transform_0(%arg0: i32) -> (i32, i32) {
    %c0_i32 = arith.constant 0 : i32
    %c0_i32_0 = arith.constant 0 : i32
    return %arg0, %c0_i32 : i32, i32
  }
  func.func @transform_1(%arg0: i32) -> (i32, i32) {
    %c0_i32 = arith.constant 0 : i32
    %c0_i32_0 = arith.constant 0 : i32
    return %arg0, %c0_i32 : i32, i32
  }
  func.func @transform_2(%arg0: i32) -> (i32, i32) {
    %c0_i32 = arith.constant 0 : i32
    %c0_i32_0 = arith.constant 0 : i32
    return %arg0, %c0_i32 : i32, i32
  }
}

</mosaic_0001>

<llo_original>
// kernel: crasp_transformer_forward.1
$region0: #{crasp_transformer_forward.1}
  #allocation0 [shape = 'u32[]', space=smem, size = 0x4, offset = 0x4, fixed_abs, tag = 'smem constant byte address 0x4 - core index']
  #allocation1 [shape = 'u32[144,128]{1,0:T(1,128)}', space=vmem, size = 0x12000, scoped, tag = 'internal scratch']
  #allocation2 [shape = 'f32[8,128]{1,0:T(8,128)}', space=vmem, size = 0x1000, scoped, tag = 'scratch operand']
  #allocation3 [shape = 'f32[1,128]{1,0:T(1,128)}', space=vmem, size = 0x200, scoped, tag = 'scratch operand']
  %s0 = inlined_call_operand.vmem [shape: f32[8,1], index: 0, kind: input, shape index: {}]
  %s1 = inlined_call_operand.vmem [shape: f32[8,128], index: 1, kind: input, shape index: {}, may-alias: {1,2}]
  %s2 = inlined_call_operand.vmem [shape: f32[8,128], index: 2, kind: output, shape index: {}, may-alias: {1,2}]
  %s3 = sld [smem:[#allocation0]]
  $region22: #{crasp_transformer_forward.1} parent=0
    _
  %s5 = ssub.s32 1, %s3
  %s6 = scalar_select 0, %s5, %s3
  // Predicated region
  $region2: #{crasp_transformer_forward.1} parent=0 // pred_check
    _
  $region3: #{crasp_transformer_forward.1} parent=0 // pred_check_branch
    %8 = sbr.rel (0) target = $region5
  $region4: #{crasp_transformer_forward.1} parent=0 // pred_region
    _
  $region5: #{crasp_transformer_forward.1} parent=0 // pred_fallthru
    _
  // Predicated region
  $region6: #{crasp_transformer_forward.1} parent=0 // pred_check
    _
  $region7: #{crasp_transformer_forward.1} parent=0 // pred_check_branch
    %10 = sbr.rel (0) target = $region9
  $region8: #{crasp_transformer_forward.1} parent=0 // pred_region
    _
  $region9: #{crasp_transformer_forward.1} parent=0 // pred_fallthru
    _
  %p11 = scmp.eq.s32.totalorder 0, 0
  // Predicated region
  $region10: #{crasp_transformer_forward.1} parent=0 // pred_check
    %p12 = pneg %p11
  $region11: #{crasp_transformer_forward.1} parent=0 // pred_check_branch
    %14 = sbr.rel (%p12) target = $region13
  $region12: #{crasp_transformer_forward.1} parent=0 // pred_region
    %15 = vst [vmem:[#allocation3] sm:$0x1] 0.0
  $region13: #{crasp_transformer_forward.1} parent=0 // pred_fallthru
    _
  %v16 = vld [vmem:[%s1] sm:$0xff]
  %v17 = vlaneseq
  %v18 = vand.u32 %v17, 127
  %vm19 = vcmp.eq.s32.totalorder %v18, 4
  %v20 = vsel %vm19, %v16, 0.0
  %21 = vadd.xlane.f32.xlu0 %v20
  %v22 = vpop.xlane.xlu0 %21
  %vm23 = vcmp.eq.s32.totalorder %v18, 5
  %v24 = vsel %vm23, %v16, 0.0
  %25 = vadd.xlane.f32.xlu0 %v24
  %v26 = vpop.xlane.xlu0 %25
  %vm27 = vcmp.eq.s32.totalorder %v18, 8
  %v28 = vadd.f32 %v16, %v22
  %vm29 = vcmp.eq.s32.totalorder %v18, 9
  %v30 = vadd.f32 %v16, %v26
  %v31 = vsel %vm29, %v30, 0.0
  %v32 = vsel %vm27, %v28, %v31
  %33 = vst [vmem:[#allocation2] sm:$0xff] %v32
  %v34 = vld [vmem:[#allocation3] sm:$0x1]
  %v35 = vld [vmem:[#allocation2] sm:$0x1]
  %v36 = vadd.f32 %v34, %v35
  %37 = vst [vmem:[#allocation2] sm:$0x1] %v36
  %v38 = vld [vmem:[#allocation2 + $0x1] sm:$0x1]
  %v39 = vadd.f32 %v36, %v38
  %40 = vst [vmem:[#allocation2 + $0x1] sm:$0x1] %v39
  %v41 = vld [vmem:[#allocation2 + $0x2] sm:$0x1]
  %v42 = vadd.f32 %v39, %v41
  %43 = vst [vmem:[#allocation2 + $0x2] sm:$0x1] %v42
  %v44 = vld [vmem:[#allocation2 + $0x3] sm:$0x1]
  %v45 = vadd.f32 %v42, %v44
  %46 = vst [vmem:[#allocation2 + $0x3] sm:$0x1] %v45
  %v47 = vld [vmem:[#allocation2 + $0x4] sm:$0x1]
  %v48 = vadd.f32 %v45, %v47
  %49 = vst [vmem:[#allocation2 + $0x4] sm:$0x1] %v48
  %v50 = vld [vmem:[#allocation2 + $0x5] sm:$0x1]
  %v51 = vadd.f32 %v48, %v50
  %52 = vst [vmem:[#allocation2 + $0x5] sm:$0x1] %v51
  %v53 = vld [vmem:[#allocation2 + $0x6] sm:$0x1]
  %v54 = vadd.f32 %v51, %v53
  %55 = vst [vmem:[#allocation2 + $0x6] sm:$0x1] %v54
  %v56 = vld [vmem:[#allocation2 + $0x7] sm:$0x1]
  %v57 = vadd.f32 %v54, %v56
  %58 = vst [vmem:[#allocation2 + $0x7] sm:$0x1] %v57
  %59 = vst [vmem:[#allocation3] sm:$0x1] %v57
  %v60 = vld [vmem:[#allocation2] sm:$0xff]
  %v61 = vld [vmem:[%s0] sm:$0xff]
  %63 = vset.pattern.permute.xlu0 0
  %64 = vperm.xlu0 %63, %v61
  %v65 = vpop.permute.xlu0 %64
  %v67 = vmul.f32 %v60, %v65
  %v68 = vadd.f32 %v16, %v67
  %vm69 = vcmp.eq.s32.totalorder %v18, 6
  %v70 = vsel %vm69, %v68, 0.0
  %71 = vadd.xlane.f32.xlu0 %v70
  %v72 = vpop.xlane.xlu0 %71
  %v73 = vsel %vm27, %v68, 0.0
  %74 = vadd.xlane.f32.xlu0 %v73
  %v75 = vpop.xlane.xlu0 %74
  %v76 = vadd.f32 %v75, %v72
  %v77 = vmul.f32 %v76, -0.5
  %v78 = vmax.f32 %v77, 0.0
  %v79 = vsub.f32 0.0, %v72
  %v80 = vmax.f32 %v79, 0.0
  %v81 = vsub.f32 %v78, %v80
  %v82 = vsub.f32 0.0, %v81
  %v83 = vsel %vm29, %v82, 0.0
  %v84 = vsel %vm27, %v81, %v83
  %v85 = vadd.f32 %v68, %v84
  %86 = vst [vmem:[%s2] sm:$0xff] %v85
  // Predicated region
  $region14: #{crasp_transformer_forward.1} parent=0 // pred_check
    _
  $region15: #{crasp_transformer_forward.1} parent=0 // pred_check_branch
    %88 = sbr.rel (0) target = $region17
  $region16: #{crasp_transformer_forward.1} parent=0 // pred_region
    _
  $region17: #{crasp_transformer_forward.1} parent=0 // pred_fallthru
    _
  // Predicated region
  $region18: #{crasp_transformer_forward.1} parent=0 // pred_check
    _
  $region19: #{crasp_transformer_forward.1} parent=0 // pred_check_branch
    %90 = sbr.rel (0) target = $region21
  $region20: #{crasp_transformer_forward.1} parent=0 // pred_region
    _
  $region21: #{crasp_transformer_forward.1} parent=0 // pred_fallthru
    _

</llo_original>
